<compile_context>
chip_gen: v7x
topology: tpu7x:2x2x1
jax: 0.10.0
libtpu: 0.0.40
codegen_flags: <defaults>
</compile_context>

<pallas_src>
import functools

import numpy as np
import jax
import jax.numpy as jnp
from jax.experimental import pallas as pl
from jax.experimental.pallas import tpu as pltpu


N_CHEB = 8                 # number of Chebyshev basis polynomials (module's `n`)
LANES = 128
DEFAULT_TILE_ROWS = 512    # rows per grid step (multiple of 8)


def cheb_coef_table(n):
    """Reproduce ChebBasis.__init__ coefficient recurrence exactly (static)."""
    basis = [[1]]
    if n > 1:
        basis.append([0, 1])
    for i in range(2, n):
        c0 = basis[i - 2]
        c1 = basis[i - 1]
        coefs = [0] * (i + 1)
        coefs[0] = -c0[0]
        for j in range(1, i - 1):
            coefs[j] = 2 * c1[j - 1] - c0[j]
        coefs[i - 1] = 2 * c1[i - 2]
        coefs[i] = 2 * c1[i - 1]
        basis.append(coefs)
    return [list(b) for b in basis[:n]]


def _cheb_kernel(wb_ref, x_ref, out_ref, *, n):
    # wb_ref:  SMEM (2,) f32       -> [weight, bias] of nn.Linear(1, 1)
    # x_ref:   VMEM (tile, 128) f32
    # out_ref: VMEM (n, tile, 128) f32  (lane-dense stores, poly index leading)
    w = wb_ref[0]
    b = wb_ref[1]
    z = x_ref[...] * w + b                 # affine: nn.Linear(1, 1)

    # Chebyshev recurrence: T0 = 1, T1 = z, Tk = 2*z*T(k-1) - T(k-2)
    t_m2 = jnp.ones_like(z)                # T0
    out_ref[0] = t_m2
    if n > 1:
        t_m1 = z                           # T1
        out_ref[1] = t_m1
        z2 = z + z                         # hoisted 2*z
        for k in range(2, n):              # static unroll, n is small
            t = z2 * t_m1 - t_m2
            out_ref[k] = t
            t_m2, t_m1 = t_m1, t


def cheb_rand_basis(x, weight, bias, n=N_CHEB,
                    tile_rows=DEFAULT_TILE_ROWS, channels_first=False):
    """Forward of ChebRandBasis.

    x: (..., 1) f32 -> (..., 1, n) f32   (or (n, ..., 1) if channels_first).
    """
    assert x.shape[-1] == 1
    lead = x.shape[:-1]
    m = int(np.prod(lead)) if lead else 1

    rows = pl.cdiv(m, LANES)
    rows8 = ((rows + 7) // 8) * 8
    # Biggest tile that fits comfortably, clamped to the (8-aligned) row count.
    tile_rows = max(8, min(((tile_rows + 7) // 8) * 8, rows8))
    rows_pad = pl.cdiv(rows8, tile_rows) * tile_rows
    total = rows_pad * LANES

    x_flat = x.reshape(-1).astype(jnp.float32)
    x_flat = jnp.pad(x_flat, (0, total - m))     # single pad, no zeros+set pass
    x2d = x_flat.reshape(rows_pad, LANES)

    wb = jnp.stack([jnp.asarray(weight, jnp.float32).reshape(()),
                    jnp.asarray(bias, jnp.float32).reshape(())])

    grid = (rows_pad // tile_rows,)
    cost = pl.CostEstimate(
        flops=3 * n * total,
        transcendentals=0,
        bytes_accessed=4 * total + 4 * n * total + 8,
    )

    out = pl.pallas_call(
        functools.partial(_cheb_kernel, n=n),
        out_shape=jax.ShapeDtypeStruct((n, rows_pad, LANES), jnp.float32),
        grid_spec=pltpu.PrefetchScalarGridSpec(
            num_scalar_prefetch=0,
            grid=grid,
            in_specs=[
                pl.BlockSpec(memory_space=pltpu.MemorySpace.SMEM),   # (w, b)
                pl.BlockSpec((tile_rows, LANES), lambda i: (i, 0)),  # x tile
            ],
            out_specs=pl.BlockSpec((n, tile_rows, LANES),
                                   lambda i: (0, i, 0)),
        ),
        compiler_params=pltpu.CompilerParams(
            dimension_semantics=("parallel",)),
        cost_estimate=cost,
    )(wb, x2d)

    out_flat = out.reshape(n, total)[:, :m]      # drop padding
    if channels_first:
        # Transpose-free layout for consumers that accept basis-index-first.
        return out_flat.reshape((n,) + lead + (1,))

    # PyTorch module layout (..., 1, n): unavoidable (n, M) -> (M, n) transpose.
    return jnp.transpose(out_flat, (1, 0)).reshape(lead + (1, n))


def _reference_np(x, weight, bias, n):
    """float64 numpy reference mirroring the PyTorch module exactly
    (affine, then each Poly evaluated from its monomial coefficients)."""
    x64 = np.asarray(x, dtype=np.float64)
    w = float(np.asarray(weight).reshape(()))
    b = float(np.asarray(bias).reshape(()))
    z = x64 * w + b
    coefs = cheb_coef_table(n)
    outs = []
    for i in range(n):
        u = np.zeros_like(z)
        p = np.ones_like(z)
        for c in coefs[i]:
            u = u + 1.0 * c * p
            p = p * z
        outs.append(u)
    return np.stack(outs, axis=-1)


if __name__ == "__main__":
    key = jax.random.PRNGKey(0)
    kx, kw, kb = jax.random.split(key, 3)

    # small input consistent with nn.Linear(1, 1): trailing singleton feature
    x = jax.random.normal(kx, (2, 8, 128, 1), dtype=jnp.float32)
    # deterministic synthetic parameters for affine = nn.Linear(1, 1)
    weight = jax.random.uniform(kw, (1, 1), dtype=jnp.float32,
                                minval=-1.0, maxval=1.0)
    bias = jax.random.uniform(kb, (1,), dtype=jnp.float32,
                              minval=-1.0, maxval=1.0)

    out = cheb_rand_basis(x, weight, bias, n=N_CHEB)
    out = jax.block_until_ready(out)

    ref = _reference_np(np.asarray(x), np.asarray(weight), np.asarray(bias),
                        N_CHEB)
    assert out.shape == x.shape + (N_CHEB,), (out.shape, x.shape)
    # f32 kernel vs f64 exact module semantics: tolerance covers the inherent
    # f32 rounding of the affine + degree-7 polynomial evaluation.
    np.testing.assert_allclose(np.asarray(out), ref.reshape(out.shape),
                               rtol=1e-4, atol=1e-4)
    print("KERNEL_OK")
</pallas_src>

<mosaic_0001>
module attributes {stable_mosaic.version = 11 : i64} {
  func.func @_cheb_kernel(%arg0: i32, %arg1: memref<2xf32, #tpu.memory_space<smem>>, %arg2: memref<16x128xf32, #tpu.memory_space<vmem>>, %arg3: memref<8x16x128xf32, #tpu.memory_space<vmem>>) attributes {dimension_semantics = [#tpu.dimension_semantics<parallel>], iteration_bounds = array<i64: 1>, scalar_prefetch = 0 : i64, scratch_operands = 0 : i64, tpu.core_type = #tpu.core_type<tc>, window_params = [{transform_indices = @transform_0, window_bounds = array<i64: 2>}, {transform_indices = @transform_1, window_bounds = array<i64: 16, 128>}, {transform_indices = @transform_2, window_bounds = array<i64: 8, 16, 128>}]} {
    %c0 = arith.constant 0 : index
    %0 = memref.load %arg1[%c0] : memref<2xf32, #tpu.memory_space<smem>>
    %c1 = arith.constant 1 : index
    %1 = memref.load %arg1[%c1] : memref<2xf32, #tpu.memory_space<smem>>
    %c0_0 = arith.constant 0 : index
    %c0_1 = arith.constant 0 : index
    %2 = vector.load %arg2[%c0_0, %c0_1] : memref<16x128xf32, #tpu.memory_space<vmem>>, vector<16x128xf32>
    %3 = vector.broadcast %0 : f32 to vector<16x128xf32>
    %4 = arith.mulf %2, %3 : vector<16x128xf32>
    %5 = vector.broadcast %1 : f32 to vector<16x128xf32>
    %6 = arith.addf %4, %5 : vector<16x128xf32>
    %cst = arith.constant 1.000000e+00 : f32
    %7 = vector.broadcast %cst : f32 to vector<16x128xf32>
    %c0_2 = arith.constant 0 : index
    %c0_3 = arith.constant 0 : index
    %c0_4 = arith.constant 0 : index
    %8 = vector.load %arg3[%c0_2, %c0_3, %c0_4] : memref<8x16x128xf32, #tpu.memory_space<vmem>>, vector<1x16x128xf32>
    %9 = vector.shape_cast %8 : vector<1x16x128xf32> to vector<16x128xf32>
    %10 = vector.shape_cast %7 : vector<16x128xf32> to vector<1x16x128xf32>
    tpu.vector_store %arg3[%c0_2, %c0_3, %c0_4], %10 {strides = array<i32>} : memref<8x16x128xf32, #tpu.memory_space<vmem>>, vector<1x16x128xf32>,
    %c1_5 = arith.constant 1 : index
    %c0_6 = arith.constant 0 : index
    %c0_7 = arith.constant 0 : index
    %11 = vector.load %arg3[%c1_5, %c0_6, %c0_7] : memref<8x16x128xf32, #tpu.memory_space<vmem>>, vector<1x16x128xf32>
    %12 = vector.shape_cast %11 : vector<1x16x128xf32> to vector<16x128xf32>
    %13 = vector.shape_cast %6 : vector<16x128xf32> to vector<1x16x128xf32>
    tpu.vector_store %arg3[%c1_5, %c0_6, %c0_7], %13 {strides = array<i32>} : memref<8x16x128xf32, #tpu.memory_space<vmem>>, vector<1x16x128xf32>,
    %14 = arith.addf %6, %6 : vector<16x128xf32>
    %15 = arith.mulf %14, %6 : vector<16x128xf32>
    %16 = arith.subf %15, %7 : vector<16x128xf32>
    %c2 = arith.constant 2 : index
    %c0_8 = arith.constant 0 : index
    %c0_9 = arith.constant 0 : index
    %17 = vector.load %arg3[%c2, %c0_8, %c0_9] : memref<8x16x128xf32, #tpu.memory_space<vmem>>, vector<1x16x128xf32>
    %18 = vector.shape_cast %17 : vector<1x16x128xf32> to vector<16x128xf32>
    %19 = vector.shape_cast %16 : vector<16x128xf32> to vector<1x16x128xf32>
    tpu.vector_store %arg3[%c2, %c0_8, %c0_9], %19 {strides = array<i32>} : memref<8x16x128xf32, #tpu.memory_space<vmem>>, vector<1x16x128xf32>,
    %20 = arith.mulf %14, %16 : vector<16x128xf32>
    %21 = arith.subf %20, %6 : vector<16x128xf32>
    %c3 = arith.constant 3 : index
    %c0_10 = arith.constant 0 : index
    %c0_11 = arith.constant 0 : index
    %22 = vector.load %arg3[%c3, %c0_10, %c0_11] : memref<8x16x128xf32, #tpu.memory_space<vmem>>, vector<1x16x128xf32>
    %23 = vector.shape_cast %22 : vector<1x16x128xf32> to vector<16x128xf32>
    %24 = vector.shape_cast %21 : vector<16x128xf32> to vector<1x16x128xf32>
    tpu.vector_store %arg3[%c3, %c0_10, %c0_11], %24 {strides = array<i32>} : memref<8x16x128xf32, #tpu.memory_space<vmem>>, vector<1x16x128xf32>,
    %25 = arith.mulf %14, %21 : vector<16x128xf32>
    %26 = arith.subf %25, %16 : vector<16x128xf32>
    %c4 = arith.constant 4 : index
    %c0_12 = arith.constant 0 : index
    %c0_13 = arith.constant 0 : index
    %27 = vector.load %arg3[%c4, %c0_12, %c0_13] : memref<8x16x128xf32, #tpu.memory_space<vmem>>, vector<1x16x128xf32>
    %28 = vector.shape_cast %27 : vector<1x16x128xf32> to vector<16x128xf32>
    %29 = vector.shape_cast %26 : vector<16x128xf32> to vector<1x16x128xf32>
    tpu.vector_store %arg3[%c4, %c0_12, %c0_13], %29 {strides = array<i32>} : memref<8x16x128xf32, #tpu.memory_space<vmem>>, vector<1x16x128xf32>,
    %30 = arith.mulf %14, %26 : vector<16x128xf32>
    %31 = arith.subf %30, %21 : vector<16x128xf32>
    %c5 = arith.constant 5 : index
    %c0_14 = arith.constant 0 : index
    %c0_15 = arith.constant 0 : index
    %32 = vector.load %arg3[%c5, %c0_14, %c0_15] : memref<8x16x128xf32, #tpu.memory_space<vmem>>, vector<1x16x128xf32>
    %33 = vector.shape_cast %32 : vector<1x16x128xf32> to vector<16x128xf32>
    %34 = vector.shape_cast %31 : vector<16x128xf32> to vector<1x16x128xf32>
    tpu.vector_store %arg3[%c5, %c0_14, %c0_15], %34 {strides = array<i32>} : memref<8x16x128xf32, #tpu.memory_space<vmem>>, vector<1x16x128xf32>,
    %35 = arith.mulf %14, %31 : vector<16x128xf32>
    %36 = arith.subf %35, %26 : vector<16x128xf32>
    %c6 = arith.constant 6 : index
    %c0_16 = arith.constant 0 : index
    %c0_17 = arith.constant 0 : index
    %37 = vector.load %arg3[%c6, %c0_16, %c0_17] : memref<8x16x128xf32, #tpu.memory_space<vmem>>, vector<1x16x128xf32>
    %38 = vector.shape_cast %37 : vector<1x16x128xf32> to vector<16x128xf32>
    %39 = vector.shape_cast %36 : vector<16x128xf32> to vector<1x16x128xf32>
    tpu.vector_store %arg3[%c6, %c0_16, %c0_17], %39 {strides = array<i32>} : memref<8x16x128xf32, #tpu.memory_space<vmem>>, vector<1x16x128xf32>,
    %40 = arith.mulf %14, %36 : vector<16x128xf32>
    %41 = arith.subf %40, %31 : vector<16x128xf32>
    %c7 = arith.constant 7 : index
    %c0_18 = arith.constant 0 : index
    %c0_19 = arith.constant 0 : index
    %42 = vector.load %arg3[%c7, %c0_18, %c0_19] : memref<8x16x128xf32, #tpu.memory_space<vmem>>, vector<1x16x128xf32>
    %43 = vector.shape_cast %42 : vector<1x16x128xf32> to vector<16x128xf32>
    %44 = vector.shape_cast %41 : vector<16x128xf32> to vector<1x16x128xf32>
    tpu.vector_store %arg3[%c7, %c0_18, %c0_19], %44 {strides = array<i32>} : memref<8x16x128xf32, #tpu.memory_space<vmem>>, vector<1x16x128xf32>,
    return
  }
  func.func @transform_0(%arg0: i32) -> i32 {
    %c0_i32 = arith.constant 0 : i32
    %c0_i32_0 = arith.constant 0 : i32
    return %c0_i32 : i32
  }
  func.func @transform_1(%arg0: i32) -> (i32, i32) {
    %c0_i32 = arith.constant 0 : i32
    %c0_i32_0 = arith.constant 0 : i32
    return %arg0, %c0_i32 : i32, i32
  }
  func.func @transform_2(%arg0: i32) -> (i32, i32, i32) {
    %c0_i32 = arith.constant 0 : i32
    %c0_i32_0 = arith.constant 0 : i32
    %c0_i32_1 = arith.constant 0 : i32
    return %c0_i32, %arg0, %c0_i32_0 : i32, i32, i32
  }
}

</mosaic_0001>

<llo_original>
// kernel: tpu_custom_call.1
$region0: #{tpu_custom_call.1}
  #allocation0 [shape = 'u32[]', space=smem, size = 0x4, offset = 0x4, fixed_abs, tag = 'smem constant byte address 0x4 - core index']
  #allocation1 [shape = 'u32[144,128]{1,0:T(1,128)}', space=vmem, size = 0x12000, scoped, tag = 'internal scratch']
  %s0 = inlined_call_operand.hbm [shape: f32[2], index: 0, kind: input, shape index: {}]
  %s1 = inlined_call_operand.hbm [shape: f32[16,128], index: 1, kind: input, shape index: {}]
  %s2 = inlined_call_operand.hbm [shape: f32[8,16,128], index: 2, kind: output, shape index: {}]
  %s3 = sld [smem:[#allocation0]]
  $region26: #{tpu_custom_call.1} parent=0
    _
  %s5 = ssub.s32 1, %s3
  %s6 = scalar_select 0, %s5, %s3
  $region1: #{tpu_custom_call.1} parent=0
    #allocation2 [shape = 'u8[512]{0}', space=smem, size = 0x200, scoped, tag = 'input window, operand 0, single buffered']
    #allocation3 [shape = 's32[1]{0}', space=sflag, size = 0x4, scoped, tag = 'scoped memory for tpu_custom_call.1']
    #allocation4 [shape = 's32[1]{0}', space=sflag, size = 0x4, scoped, tag = 'scoped memory for tpu_custom_call.1']
    #allocation5 [shape = 's32[1]{0}', space=sflag, size = 0x4, scoped, tag = 'scoped memory for tpu_custom_call.1']
    #allocation6 [shape = 'u8[8192]{0}', space=vmem, size = 0x2000, scoped, tag = 'input window, operand 1, single buffered']
    #allocation7 [shape = 'u8[65536]{0}', space=vmem, size = 0x10000, scoped, tag = 'output window, operand 0, single buffered']
    %7 = vsyncpa [#allocation5], 0
    %8 = vsyncpa [#allocation3], 0
    %9 = vsyncpa [#allocation4], 0
    // Predicated region
    $region2: #{tpu_custom_call.1} parent=1 // pred_check
      _
    $region3: #{tpu_custom_call.1} parent=1 // pred_check_branch
      %11 = sbr.rel (0) target = $region5
    $region4: #{tpu_custom_call.1} parent=1 // pred_region
      %s13 = ssub.s32 16, 16
      %14 = vsyncadd [#allocation5], %s13
      %17 = dma.hbm_to_smem %s0, 16, [#allocation2], [#allocation5]
    $region5: #{tpu_custom_call.1} parent=1 // pred_fallthru
      _
    // Predicated region
    $region6: #{tpu_custom_call.1} parent=1 // pred_check
      _
    $region7: #{tpu_custom_call.1} parent=1 // pred_check_branch
      %19 = sbr.rel (0) target = $region9
    $region8: #{tpu_custom_call.1} parent=1 // pred_region
      %s21 = ssub.s32 256, 256
      %22 = vsyncadd [#allocation3], %s21
      %s23 = sshll.u32 [#allocation6], 4
      %s24 = int_to_ptr.vmem [resolvable:$true] %s23
      %29 = dma.hbm_to_vmem [thread:$0]  %s1, 256, %s24, [#allocation3], 128, 128, 8
    $region9: #{tpu_custom_call.1} parent=1 // pred_fallthru
      _
    // Predicated region
    $region10: #{tpu_custom_call.1} parent=1 // pred_check
      _
    $region11: #{tpu_custom_call.1} parent=1 // pred_check_branch
      %31 = sbr.rel (0) target = $region13
    $region12: #{tpu_custom_call.1} parent=1 // pred_region
      %32 = dma.done [#allocation5], 16
    $region13: #{tpu_custom_call.1} parent=1 // pred_fallthru
      _
    // Predicated region
    $region14: #{tpu_custom_call.1} parent=1 // pred_check
      _
    $region15: #{tpu_custom_call.1} parent=1 // pred_check_branch
      %34 = sbr.rel (0) target = $region17
    $region16: #{tpu_custom_call.1} parent=1 // pred_region
      %35 = dma.done [#allocation3], 256
    $region17: #{tpu_custom_call.1} parent=1 // pred_fallthru
      _
    %36 = sfence
    %s37 = sld [smem:[#allocation2]]
    %s38 = sld [smem:[#allocation2 + $0x1]]
    %v39 = vld [vmem:[#allocation6] sm:$0xff]
    %v40 = vld [vmem:[#allocation6 + $0x8] sm:$0xff]
    %v41 = vstv %s37
    %v42 = vmul.f32 %v39, %v41
    %v43 = vmul.f32 %v40, %v41
    %v44 = vstv %s38
    %v45 = vadd.f32 %v42, %v44
    %v46 = vadd.f32 %v43, %v44
    %47 = vst [vmem:[#allocation7] sm:$0xff] 1.0
    %48 = vst [vmem:[#allocation7 + $0x8] sm:$0xff] 1.0
    %s49 = scalar_lea.vmem [#allocation7], 16
    %50 = vst [vmem:[%s49] sm:$0xff] %v45
    %51 = vst [vmem:[%s49 + $0x8] sm:$0xff] %v46
    %v52 = vadd.f32 %v45, %v45
    %v53 = vadd.f32 %v46, %v46
    %v54 = vmul.f32 %v52, %v45
    %v55 = vmul.f32 %v53, %v46
    %v56 = vsub.f32 %v54, 1.0
    %v57 = vsub.f32 %v55, 1.0
    %s58 = scalar_lea.vmem [#allocation7], 32
    %59 = vst [vmem:[%s58] sm:$0xff] %v56
    %60 = vst [vmem:[%s58 + $0x8] sm:$0xff] %v57
    %v61 = vmul.f32 %v52, %v56
    %v62 = vmul.f32 %v53, %v57
    %v63 = vsub.f32 %v61, %v45
    %v64 = vsub.f32 %v62, %v46
    %s65 = scalar_lea.vmem [#allocation7], 48
    %66 = vst [vmem:[%s65] sm:$0xff] %v63
    %67 = vst [vmem:[%s65 + $0x8] sm:$0xff] %v64
    %v68 = vmul.f32 %v52, %v63
    %v69 = vmul.f32 %v53, %v64
    %v70 = vsub.f32 %v68, %v56
    %v71 = vsub.f32 %v69, %v57
    %s72 = scalar_lea.vmem [#allocation7], 64
    %73 = vst [vmem:[%s72] sm:$0xff] %v70
    %74 = vst [vmem:[%s72 + $0x8] sm:$0xff] %v71
    %v75 = vmul.f32 %v52, %v70
    %v76 = vmul.f32 %v53, %v71
    %v77 = vsub.f32 %v75, %v63
    %v78 = vsub.f32 %v76, %v64
    %s79 = scalar_lea.vmem [#allocation7], 80
    %80 = vst [vmem:[%s79] sm:$0xff] %v77
    %81 = vst [vmem:[%s79 + $0x8] sm:$0xff] %v78
    %v82 = vmul.f32 %v52, %v77
    %v83 = vmul.f32 %v53, %v78
    %v84 = vsub.f32 %v82, %v70
    %v85 = vsub.f32 %v83, %v71
    %s86 = scalar_lea.vmem [#allocation7], 96
    %87 = vst [vmem:[%s86] sm:$0xff] %v84
    %88 = vst [vmem:[%s86 + $0x8] sm:$0xff] %v85
    %v89 = vmul.f32 %v52, %v84
    %v90 = vmul.f32 %v53, %v85
    %v91 = vsub.f32 %v89, %v77
    %v92 = vsub.f32 %v90, %v78
    %s93 = scalar_lea.vmem [#allocation7], 112
    %94 = vst [vmem:[%s93] sm:$0xff] %v91
    %95 = vst [vmem:[%s93 + $0x8] sm:$0xff] %v92
    // Predicated region
    $region18: #{tpu_custom_call.1} parent=1 // pred_check
      _
    $region19: #{tpu_custom_call.1} parent=1 // pred_check_branch
      %97 = sbr.rel (0) target = $region21
    $region20: #{tpu_custom_call.1} parent=1 // pred_region
      %s99 = ssub.s32 2048, 2048
      %100 = vsyncadd [#allocation4], %s99
      %s101 = sshll.u32 [#allocation7], 4
      %s102 = int_to_ptr.vmem [resolvable:$true] %s101
      %107 = dma.vmem_to_hbm [thread:$0]  %s102, 2048, %s2, [#allocation4], 128, 128, 8
    $region21: #{tpu_custom_call.1} parent=1 // pred_fallthru
      _
    // Predicated region
    $region22: #{tpu_custom_call.1} parent=1 // pred_check
      _
    $region23: #{tpu_custom_call.1} parent=1 // pred_check_branch
      %109 = sbr.rel (0) target = $region25
    $region24: #{tpu_custom_call.1} parent=1 // pred_region
      %110 = dma.done [#allocation4], 2048
    $region25: #{tpu_custom_call.1} parent=1 // pred_fallthru
      _
    %111 = vsyncpa [#allocation3], 1
    %112 = vsyncpa [#allocation4], 1
    %113 = vsyncpa [#allocation5], 1

</llo_original>
